<compile_context>
chip_gen: v5e
topology: v5e:2x2
jax: 0.10.0
libtpu: 0.0.40
codegen_flags: <defaults>
</compile_context>

<pallas_src>
import jax
import jax.numpy as jnp
from jax.experimental import pallas as pl
from jax.experimental.pallas import tpu as pltpu

EPS = 1e-5


def _bn_flow_forward_kernel(u_ref, beta_ref, log_gamma_ref, mean_ref, var_ref,
                            x_ref):
    """Elementwise affine de-normalization on one (TILE_ROWS, L) tile.

    u_ref:         (TILE_ROWS, L)  VMEM
    beta_ref:      (1, L)          VMEM
    log_gamma_ref: (1, L)          VMEM
    mean_ref:      (1, L)          VMEM  (running_mean, possibly lane-tiled)
    var_ref:       (1, L)          VMEM  (running_var, possibly lane-tiled)
    x_ref:         (TILE_ROWS, L)  VMEM  output
    """
    lg = log_gamma_ref[...]
    var = var_ref[...]
    # (1, L) prep: exp/sqrt run on the EUP slot over L elements only.
    scale = jnp.exp(-lg) * jnp.sqrt(var + EPS)
    shift = mean_ref[...] - beta_ref[...] * scale
    # Single FMA per element, broadcast over the batch (sublane) axis.
    x_ref[...] = (u_ref[...] * scale + shift).astype(x_ref.dtype)


def batch_norm_flow_forward(u, log_gamma, beta, running_mean, running_var):
    """Pallas wrapper. u: (N, D) f32; params: (D,) f32. Returns (x, logdet)."""
    n, d = u.shape
    out_dtype = u.dtype

    # log|det J| depends only on the parameters -> plain JAX (tiny, fused).
    logdet = -jnp.sum(log_gamma - 0.5 * jnp.log(running_var + EPS))

    # Lane-density folding: pack F = 128/D original rows into one kernel row.
    fold = 1
    if d < 128 and 128 % d == 0 and n % (128 // d) == 0:
        fold = 128 // d
    rows = n // fold
    lanes = d * fold

    u2 = u.reshape(rows, lanes)
    lg2 = jnp.tile(log_gamma, fold).reshape(1, lanes)
    beta2 = jnp.tile(beta, fold).reshape(1, lanes)
    mu2 = jnp.tile(running_mean, fold).reshape(1, lanes)
    var2 = jnp.tile(running_var, fold).reshape(1, lanes)

    # Tile the (folded) batch axis: ~2 MiB tiles, multiple of 8 sublanes.
    row_bytes = lanes * u2.dtype.itemsize
    target_tile_bytes = 2 * 1024 * 1024
    tile_rows = max(8, (target_tile_bytes // row_bytes) // 8 * 8)
    if tile_rows >= rows:
        tile_rows = rows  # single block == full array dims (always legal)
    grid = (pl.cdiv(rows, tile_rows),)

    # VMEM budget: in + out, double-buffered, plus params/headroom.
    tile_bytes = tile_rows * row_bytes
    vmem_limit = int(max(4 * tile_bytes + (2 << 20), 16 << 20))

    row_spec = pl.BlockSpec((tile_rows, lanes), lambda i: (i, 0))
    param_spec = pl.BlockSpec((1, lanes), lambda i: (0, 0))

    x2 = pl.pallas_call(
        _bn_flow_forward_kernel,
        out_shape=jax.ShapeDtypeStruct((rows, lanes), out_dtype),
        grid=grid,
        in_specs=[row_spec, param_spec, param_spec, param_spec, param_spec],
        out_specs=row_spec,
        # If u were dead after this call, input_output_aliases={0: 0} would
        # reuse its HBM buffer; left off here because we compare against u.
        compiler_params=pltpu.CompilerParams(
            dimension_semantics=("parallel",),
            vmem_limit_bytes=vmem_limit,
        ),
    )(u2, beta2, lg2, mu2, var2)

    return x2.reshape(n, d), logdet


def _reference_forward(u, log_gamma, beta, running_mean, running_var):
    """Pure-JAX reference matching the PyTorch _forward."""
    x = (u - beta) * jnp.exp(-log_gamma) * jnp.sqrt(running_var + EPS) + running_mean
    log_det = -jnp.sum(log_gamma - 0.5 * jnp.log(running_var + EPS))
    return x, log_det


if __name__ == "__main__":
    key = jax.random.PRNGKey(0)
    batch, input_dim = 8, 32

    # Deterministic parameter init per BatchNormFlow.__init__ (log_gamma/beta
    # zeros, running_mean zeros, running_var ones), with a small perturbation
    # so the affine path is actually exercised.
    k1, k2, k3, k4, k5 = jax.random.split(key, 5)
    log_gamma = 0.1 * jax.random.normal(k1, (input_dim,), dtype=jnp.float32)
    beta = 0.1 * jax.random.normal(k2, (input_dim,), dtype=jnp.float32)
    running_mean = 0.1 * jax.random.normal(k3, (input_dim,), dtype=jnp.float32)
    running_var = jnp.ones((input_dim,), jnp.float32) + 0.1 * jax.nn.softplus(
        jax.random.normal(k4, (input_dim,), dtype=jnp.float32))

    u = jax.random.normal(k5, (batch, input_dim), dtype=jnp.float32)

    x, logdet = batch_norm_flow_forward(u, log_gamma, beta, running_mean,
                                        running_var)
    x = jax.block_until_ready(x)
    logdet = jax.block_until_ready(logdet)

    x_ref, logdet_ref = _reference_forward(u, log_gamma, beta, running_mean,
                                           running_var)
    assert jnp.allclose(x, x_ref, atol=1e-5, rtol=1e-5)
    assert jnp.allclose(logdet, logdet_ref, atol=1e-5, rtol=1e-5)

    print("KERNEL_OK")
</pallas_src>

<mosaic_0001>
module attributes {stable_mosaic.version = 11 : i64} {
  func.func @_bn_flow_forward_kernel(%arg0: i32, %arg1: memref<2x128xf32, #tpu.memory_space<vmem>>, %arg2: memref<1x128xf32, #tpu.memory_space<vmem>>, %arg3: memref<1x128xf32, #tpu.memory_space<vmem>>, %arg4: memref<1x128xf32, #tpu.memory_space<vmem>>, %arg5: memref<1x128xf32, #tpu.memory_space<vmem>>, %arg6: memref<2x128xf32, #tpu.memory_space<vmem>>) attributes {dimension_semantics = [#tpu.dimension_semantics<parallel>], iteration_bounds = array<i64: 1>, scalar_prefetch = 0 : i64, scratch_operands = 0 : i64, tpu.core_type = #tpu.core_type<tc>, window_params = [{transform_indices = @transform_0, window_bounds = array<i64: 2, 128>}, {pipeline_mode = #tpu.pipeline_mode<synchronous>, transform_indices = @transform_1, window_bounds = array<i64: 1, 128>}, {pipeline_mode = #tpu.pipeline_mode<synchronous>, transform_indices = @transform_2, window_bounds = array<i64: 1, 128>}, {pipeline_mode = #tpu.pipeline_mode<synchronous>, transform_indices = @transform_3, window_bounds = array<i64: 1, 128>}, {pipeline_mode = #tpu.pipeline_mode<synchronous>, transform_indices = @transform_4, window_bounds = array<i64: 1, 128>}, {transform_indices = @transform_5, window_bounds = array<i64: 2, 128>}]} {
    %c0 = arith.constant 0 : index
    %c0_0 = arith.constant 0 : index
    %0 = vector.load %arg3[%c0, %c0_0] : memref<1x128xf32, #tpu.memory_space<vmem>>, vector<1x128xf32>
    %c0_1 = arith.constant 0 : index
    %c0_2 = arith.constant 0 : index
    %1 = vector.load %arg5[%c0_1, %c0_2] : memref<1x128xf32, #tpu.memory_space<vmem>>, vector<1x128xf32>
    %cst = arith.constant 0.000000e+00 : f32
    %2 = vector.broadcast %cst : f32 to vector<1x128xf32>
    %3 = arith.subf %2, %0 : vector<1x128xf32>
    %4 = math.exp %3 : vector<1x128xf32>
    %cst_3 = arith.constant 9.99999974E-6 : f32
    %5 = vector.broadcast %cst_3 : f32 to vector<1x128xf32>
    %6 = arith.addf %1, %5 : vector<1x128xf32>
    %7 = math.sqrt %6 : vector<1x128xf32>
    %8 = arith.mulf %4, %7 : vector<1x128xf32>
    %c0_4 = arith.constant 0 : index
    %c0_5 = arith.constant 0 : index
    %9 = vector.load %arg4[%c0_4, %c0_5] : memref<1x128xf32, #tpu.memory_space<vmem>>, vector<1x128xf32>
    %c0_6 = arith.constant 0 : index
    %c0_7 = arith.constant 0 : index
    %10 = vector.load %arg2[%c0_6, %c0_7] : memref<1x128xf32, #tpu.memory_space<vmem>>, vector<1x128xf32>
    %11 = arith.mulf %10, %8 : vector<1x128xf32>
    %12 = arith.subf %9, %11 : vector<1x128xf32>
    %c0_8 = arith.constant 0 : index
    %c0_9 = arith.constant 0 : index
    %13 = vector.load %arg1[%c0_8, %c0_9] : memref<2x128xf32, #tpu.memory_space<vmem>>, vector<2x128xf32>
    %14 = vector.broadcast %8 : vector<1x128xf32> to vector<2x128xf32>
    %15 = arith.mulf %13, %14 : vector<2x128xf32>
    %16 = vector.broadcast %12 : vector<1x128xf32> to vector<2x128xf32>
    %17 = arith.addf %15, %16 : vector<2x128xf32>
    %c0_10 = arith.constant 0 : index
    %c0_11 = arith.constant 0 : index
    %18 = vector.load %arg6[%c0_10, %c0_11] : memref<2x128xf32, #tpu.memory_space<vmem>>, vector<2x128xf32>
    tpu.vector_store %arg6[%c0_10, %c0_11], %17 {strides = array<i32>} : memref<2x128xf32, #tpu.memory_space<vmem>>, vector<2x128xf32>,
    return
  }
  func.func @transform_0(%arg0: i32) -> (i32, i32) {
    %c0_i32 = arith.constant 0 : i32
    %c0_i32_0 = arith.constant 0 : i32
    return %arg0, %c0_i32 : i32, i32
  }
  func.func @transform_1(%arg0: i32) -> (i32, i32) {
    %c0_i32 = arith.constant 0 : i32
    %c0_i32_0 = arith.constant 0 : i32
    %c0_i32_1 = arith.constant 0 : i32
    return %c0_i32, %c0_i32_0 : i32, i32
  }
  func.func @transform_2(%arg0: i32) -> (i32, i32) {
    %c0_i32 = arith.constant 0 : i32
    %c0_i32_0 = arith.constant 0 : i32
    %c0_i32_1 = arith.constant 0 : i32
    return %c0_i32, %c0_i32_0 : i32, i32
  }
  func.func @transform_3(%arg0: i32) -> (i32, i32) {
    %c0_i32 = arith.constant 0 : i32
    %c0_i32_0 = arith.constant 0 : i32
    %c0_i32_1 = arith.constant 0 : i32
    return %c0_i32, %c0_i32_0 : i32, i32
  }
  func.func @transform_4(%arg0: i32) -> (i32, i32) {
    %c0_i32 = arith.constant 0 : i32
    %c0_i32_0 = arith.constant 0 : i32
    %c0_i32_1 = arith.constant 0 : i32
    return %c0_i32, %c0_i32_0 : i32, i32
  }
  func.func @transform_5(%arg0: i32) -> (i32, i32) {
    %c0_i32 = arith.constant 0 : i32
    %c0_i32_0 = arith.constant 0 : i32
    return %arg0, %c0_i32 : i32, i32
  }
}

</mosaic_0001>

<llo_original>
// kernel: tpu_custom_call.1
$region0: #{tpu_custom_call.1}
  #allocation0 [shape = 'u32[]', space=smem, size = 0x4, offset = 0x4, fixed_abs, tag = 'smem constant byte address 0x4 - core index']
  #allocation1 [shape = 'u32[72,128]{1,0:T(1,128)}', space=vmem, size = 0x9000, scoped, tag = 'internal scratch']
  %s0 = inlined_call_operand.hbm [shape: f32[2,128], index: 0, kind: input, shape index: {}]
  %s1 = inlined_call_operand.hbm [shape: f32[1,128], index: 1, kind: input, shape index: {}]
  %s2 = inlined_call_operand.vmem [shape: f32[1,128], index: 2, kind: input, shape index: {}]
  %s3 = inlined_call_operand.vmem [shape: f32[1,128], index: 3, kind: input, shape index: {}]
  %s4 = inlined_call_operand.vmem [shape: f32[1,128], index: 4, kind: input, shape index: {}]
  %s5 = inlined_call_operand.hbm [shape: f32[2,128], index: 5, kind: output, shape index: {}]
  %s6 = sld [smem:[#allocation0]]
  $region38: #{tpu_custom_call.1} parent=0
    _
  %s8 = ssub.s32 1, %s6
  %s9 = scalar_select 0, %s8, %s6
  $region1: #{tpu_custom_call.1} parent=0
    #allocation2 [shape = 'u8[1024]{0}', space=vmem, size = 0x400, scoped, tag = 'input window, operand 0, single buffered']
    #allocation3 [shape = 's32[1]{0}', space=sflag, size = 0x4, scoped, tag = 'scoped memory for tpu_custom_call.1']
    #allocation4 [shape = 's32[1]{0}', space=sflag, size = 0x4, scoped, tag = 'scoped memory for tpu_custom_call.1']
    #allocation5 [shape = 'u8[512]{0}', space=vmem, size = 0x400, scoped, tag = 'input window, operand 1, single buffered']
    #allocation6 [shape = 's32[1]{0}', space=sflag, size = 0x4, scoped, tag = 'scoped memory for tpu_custom_call.1']
    #allocation7 [shape = 'u8[1024]{0}', space=vmem, size = 0x400, scoped, tag = 'output window, operand 0, single buffered']
    %10 = vsyncpa [#allocation3], 0
    %11 = vsyncpa [#allocation6], 0
    %12 = vsyncpa [#allocation4], 0
    // Predicated region
    $region2: #{tpu_custom_call.1} parent=1 // pred_check
      _
    $region3: #{tpu_custom_call.1} parent=1 // pred_check_branch
      %14 = sbr.rel (0) target = $region5
    $region4: #{tpu_custom_call.1} parent=1 // pred_region
      %16 = vsyncadd [#allocation3], 0
      %s18 = sshll.u32 %s0, 4
      %s19 = int_to_ptr.hbm [resolvable:$true] %s18
      %s20 = sshll.u32 [#allocation2], 4
      %s21 = int_to_ptr.vmem [resolvable:$true] %s20
      %23 = dma.hbm_to_vmem [thread:$0]  %s19, 32, %s21, [#allocation3]
    $region5: #{tpu_custom_call.1} parent=1 // pred_fallthru
      _
    // Predicated region
    $region6: #{tpu_custom_call.1} parent=1 // pred_check
      _
    $region7: #{tpu_custom_call.1} parent=1 // pred_check_branch
      %25 = sbr.rel (0) target = $region9
    $region8: #{tpu_custom_call.1} parent=1 // pred_region
      %27 = vsyncadd [#allocation6], 0
      %s29 = sshll.u32 %s1, 4
      %s30 = int_to_ptr.hbm [resolvable:$true] %s29
      %s31 = sshll.u32 [#allocation5], 4
      %s32 = int_to_ptr.vmem [resolvable:$true] %s31
      %34 = dma.hbm_to_vmem [thread:$0]  %s30, 16, %s32, [#allocation6]
    $region9: #{tpu_custom_call.1} parent=1 // pred_fallthru
      _
    // Predicated region
    $region10: #{tpu_custom_call.1} parent=1 // pred_check
      _
    $region11: #{tpu_custom_call.1} parent=1 // pred_check_branch
      %36 = sbr.rel (0) target = $region13
    $region12: #{tpu_custom_call.1} parent=1 // pred_region
      _
    $region13: #{tpu_custom_call.1} parent=1 // pred_fallthru
      _
    // Predicated region
    $region14: #{tpu_custom_call.1} parent=1 // pred_check
      _
    $region15: #{tpu_custom_call.1} parent=1 // pred_check_branch
      %38 = sbr.rel (0) target = $region17
    $region16: #{tpu_custom_call.1} parent=1 // pred_region
      _
    $region17: #{tpu_custom_call.1} parent=1 // pred_fallthru
      _
    // Predicated region
    $region18: #{tpu_custom_call.1} parent=1 // pred_check
      _
    $region19: #{tpu_custom_call.1} parent=1 // pred_check_branch
      %40 = sbr.rel (0) target = $region21
    $region20: #{tpu_custom_call.1} parent=1 // pred_region
      _
    $region21: #{tpu_custom_call.1} parent=1 // pred_fallthru
      _
    // Predicated region
    $region22: #{tpu_custom_call.1} parent=1 // pred_check
      _
    $region23: #{tpu_custom_call.1} parent=1 // pred_check_branch
      %42 = sbr.rel (0) target = $region25
    $region24: #{tpu_custom_call.1} parent=1 // pred_region
      %44 = dma.done [#allocation3], 32
    $region25: #{tpu_custom_call.1} parent=1 // pred_fallthru
      _
    // Predicated region
    $region26: #{tpu_custom_call.1} parent=1 // pred_check
      _
    $region27: #{tpu_custom_call.1} parent=1 // pred_check_branch
      %46 = sbr.rel (0) target = $region29
    $region28: #{tpu_custom_call.1} parent=1 // pred_region
      %48 = dma.done [#allocation6], 16
    $region29: #{tpu_custom_call.1} parent=1 // pred_fallthru
      _
    %v49 = vld [vmem:[%s2] sm:$0x1]
    %v50 = vld [vmem:[%s4] sm:$0x1]
    %v51 = vsub.f32 0.0, %v49
    %v52 = vmul.f32 %v51, 1.442695
    %v53 = vpow.pop %v52
    %v54 = vadd.f32 %v50, 1e-05
    %v55 = vrsqrt.pop %v54
    %v56 = vmul.f32 %v55, %v54
    %v57 = vmul.f32 %v56, %v55
    %v58 = vmul.f32 0.5, %v57
    %v59 = vsub.f32 1.5, %v58
    %v60 = vmul.f32 %v55, %v59
    %v61 = vmul.f32 %v54, %v60
    %vm62 = vcmp.eq.f32.partialorder %v54, inf
    %v63 = vsel %vm62, %v54, %v61
    %vm64 = vcmp.eq.f32.partialorder %v54, 0.0
    %v65 = vand.u32 %v54, 2147483648
    %v66 = vsel %vm64, %v65, %v63
    %v67 = vmul.f32 %v53, %v66
    %v68 = vld [vmem:[%s3] sm:$0x1]
    %v69 = vld [vmem:[#allocation5] sm:$0x1]
    %v70 = vmul.f32 %v69, %v67
    %v71 = vsub.f32 %v68, %v70
    %v72 = vld [vmem:[#allocation2] sm:$0x3]
    %v74 = vperm.slane %v67, 0
    %v76 = vmul.f32 %v72, %v74
    %v78 = vperm.slane %v71, 0
    %v80 = vadd.f32 %v76, %v78
    %81 = vst [vmem:[#allocation7] sm:$0x3] %v80
    // Predicated region
    $region30: #{tpu_custom_call.1} parent=1 // pred_check
      _
    $region31: #{tpu_custom_call.1} parent=1 // pred_check_branch
      %83 = sbr.rel (0) target = $region33
    $region32: #{tpu_custom_call.1} parent=1 // pred_region
      %85 = vsyncadd [#allocation4], 0
      %s87 = sshll.u32 [#allocation7], 4
      %s88 = int_to_ptr.vmem [resolvable:$true] %s87
      %s89 = sshll.u32 %s5, 4
      %s90 = int_to_ptr.hbm [resolvable:$true] %s89
      %92 = dma.vmem_to_hbm [thread:$0]  %s88, 32, %s90, [#allocation4]
    $region33: #{tpu_custom_call.1} parent=1 // pred_fallthru
      _
    // Predicated region
    $region34: #{tpu_custom_call.1} parent=1 // pred_check
      _
    $region35: #{tpu_custom_call.1} parent=1 // pred_check_branch
      %94 = sbr.rel (0) target = $region37
    $region36: #{tpu_custom_call.1} parent=1 // pred_region
      %96 = dma.done [#allocation4], 32
    $region37: #{tpu_custom_call.1} parent=1 // pred_fallthru
      _
    %97 = vsyncpa [#allocation3], 1
    %98 = vsyncpa [#allocation6], 1
    %99 = vsyncpa [#allocation4], 1

</llo_original>
